<compile_context>
chip_gen: v6e
topology: v6e:2x2x1
jax: 0.10.0
libtpu: 0.0.40
codegen_flags: <defaults>
</compile_context>

<pallas_src>
import functools

import jax
import jax.numpy as jnp
from jax.experimental import pallas as pl
from jax.experimental.pallas import tpu as pltpu

_LANE = 128  # lane width; last dim of every operand is padded to a multiple


def _round_up(x, m):
    return ((x + m - 1) // m) * m


# --------------------------------------------------------------------------
# Kernels
# --------------------------------------------------------------------------

def _mlp_kernel_resident(x_ref, w1_ref, b1_ref, w2_ref, b2_ref, o_ref):
    """Whole hidden dim resident in VMEM: one grid axis over batch tiles."""
    # Cast x to the MXU operand dtype in-kernel (hidden under the matmul).
    x = x_ref[...].astype(w1_ref.dtype)
    h = jnp.dot(x, w1_ref[...], preferred_element_type=jnp.float32)
    h = jnp.maximum(h + b1_ref[...], 0.0)            # bias + ReLU in f32 (VPU)
    y = jnp.dot(h.astype(w2_ref.dtype), w2_ref[...],
                preferred_element_type=jnp.float32)
    o_ref[...] = (y + b2_ref[...]).astype(o_ref.dtype)


def _mlp_kernel_ktiled(x_ref, w1_ref, b1_ref, w2_ref, b2_ref, o_ref, acc_ref):
    """Hidden (reduction) axis tiled: grid = (batch tiles, hidden tiles)."""
    h_idx = pl.program_id(1)

    @pl.when(h_idx == 0)
    def _():
        acc_ref[...] = jnp.zeros_like(acc_ref)

    x = x_ref[...].astype(w1_ref.dtype)
    h = jnp.dot(x, w1_ref[...], preferred_element_type=jnp.float32)
    h = jnp.maximum(h + b1_ref[...], 0.0)            # per-tile bias + ReLU
    acc_ref[...] += jnp.dot(h.astype(w2_ref.dtype), w2_ref[...],
                            preferred_element_type=jnp.float32)

    @pl.when(h_idx == pl.num_programs(1) - 1)
    def _():
        o_ref[...] = (acc_ref[...] + b2_ref[...]).astype(o_ref.dtype)


# --------------------------------------------------------------------------
# Chip / VMEM heuristics (trace-time Python only)
# --------------------------------------------------------------------------

def _chip_config():
    kind = ""
    try:
        kind = jax.devices()[0].device_kind.lower()
    except Exception:
        pass
    try:
        vmem_cap = int(pltpu.get_tpu_info().vmem_capacity_bytes)
    except Exception:
        vmem_cap = 128 * 2**20 if ("v5" in kind or "v6" in kind) else 64 * 2**20
    is_v7 = ("v7" in kind) or (vmem_cap <= 64 * 2**20)
    if is_v7:
        vmem_cap = min(vmem_cap, 64 * 2**20)     # per-TensorCore budget on v7x
    # v6e: 2x256^2 MXU + 128 MiB VMEM -> bigger M tile pays off.
    # v5e: 4x128^2 MXU, 1 vst slot, lower HBM BW -> keep the tile modest.
    default_bm = 512 if "v6" in kind else 256
    return vmem_cap, default_bm, is_v7


def _resident_vmem_bytes(block_m, in_p, hid_p, out_p, x_bytes, c_bytes, o_bytes):
    return (2 * block_m * in_p * x_bytes           # x tile (double-buffered)
            + 2 * block_m * out_p * o_bytes        # out tile (double-buffered)
            + block_m * hid_p * 4                  # f32 hidden intermediate
            + in_p * hid_p * c_bytes               # W1 resident (single buffer)
            + hid_p * out_p * c_bytes              # W2 resident (single buffer)
            + 8 * hid_p * 4 + 8 * out_p * 4)       # biases, sublane-padded


def _ktiled_vmem_bytes(block_m, in_p, tile_h, out_p, x_bytes, c_bytes, o_bytes):
    return (2 * block_m * in_p * x_bytes
            + 2 * block_m * out_p * o_bytes
            + block_m * tile_h * 4                 # f32 per-tile hidden
            + block_m * out_p * 4                  # f32 accumulator scratch
            + 2 * in_p * tile_h * c_bytes          # W1 tile (double-buffered)
            + 2 * tile_h * out_p * c_bytes         # W2 tile (double-buffered)
            + 2 * 8 * tile_h * 4 + 8 * out_p * 4)  # biases, sublane-padded


# --------------------------------------------------------------------------
# Parameter preparation (once, at load time) and forward pass
# --------------------------------------------------------------------------

def prepare_params(w1, b1, w2, b2, compute_dtype=jnp.bfloat16):
    """Pad feature dims to multiples of 128 and cast weights to the MXU operand
    dtype ONCE. Weights must already be (in, out) layout. Biases stay f32."""
    in_size, hidden_size = w1.shape
    out_size = w2.shape[1]
    in_p = _round_up(in_size, _LANE)
    hid_p = _round_up(hidden_size, _LANE)
    out_p = _round_up(out_size, _LANE)
    w1p = jnp.pad(w1, ((0, in_p - in_size), (0, hid_p - hidden_size))).astype(compute_dtype)
    w2p = jnp.pad(w2, ((0, hid_p - hidden_size), (0, out_p - out_size))).astype(compute_dtype)
    b1p = jnp.pad(b1.reshape(1, hidden_size), ((0, 0), (0, hid_p - hidden_size))).astype(jnp.float32)
    b2p = jnp.pad(b2.reshape(1, out_size), ((0, 0), (0, out_p - out_size))).astype(jnp.float32)
    return w1p, b1p, w2p, b2p


@functools.partial(jax.jit,
                   static_argnames=("out_size", "block_m", "hidden_block", "out_dtype"))
def mlp_forward(x, w1p, b1p, w2p, b2p, *, out_size=None, block_m=None,
                hidden_block=None, out_dtype=None):
    """x: (B, in_size) any float dtype; padded params from prepare_params().
    Returns (B, out_size) in out_dtype (default: the weight/compute dtype)."""
    B, in_x = x.shape
    in_p, hid_p = w1p.shape
    out_p = w2p.shape[1]
    assert in_x <= in_p, "x feature dim larger than prepared weights"
    compute_dtype = w1p.dtype
    out_dtype = compute_dtype if out_dtype is None else out_dtype

    x_bytes = jnp.dtype(x.dtype).itemsize
    c_bytes = jnp.dtype(compute_dtype).itemsize
    o_bytes = jnp.dtype(out_dtype).itemsize

    vmem_cap, default_bm, is_v7 = _chip_config()
    vmem_budget = int(0.9 * vmem_cap)

    # ---- batch tile ----------------------------------------------------
    bm = default_bm if block_m is None else block_m
    bm = _round_up(bm, _LANE)
    b128 = _round_up(B, _LANE)
    bm = min(bm, b128)
    if is_v7 and b128 >= 2 * _LANE:
        # Guarantee >= 2 grid steps so both v7x TensorCores get work.
        half = max(_LANE, ((b128 // 2) // _LANE) * _LANE)
        bm = min(bm, half)
    b_pad = _round_up(B, bm)

    # ---- pad activation only if needed (x keeps its native dtype) ------
    if (b_pad, in_p) != (B, in_x):
        xp = jnp.pad(x, ((0, b_pad - B), (0, in_p - in_x)))
    else:
        xp = x

    # ---- choose resident-weight vs hidden-tiled path --------------------
    use_ktiled = hidden_block is not None
    if not use_ktiled:
        est = _resident_vmem_bytes(bm, in_p, hid_p, out_p, x_bytes, c_bytes, o_bytes)
        use_ktiled = int(1.35 * est) > vmem_budget

    resident = dict(pipeline_mode=pl.Buffered(1))  # constant-index operands

    if not use_ktiled:
        vmem_bytes = _resident_vmem_bytes(bm, in_p, hid_p, out_p,
                                          x_bytes, c_bytes, o_bytes)
        vmem_limit = int(min(vmem_budget, max(32 * 2**20, int(1.35 * vmem_bytes))))
        out_padded = pl.pallas_call(
            _mlp_kernel_resident,
            out_shape=jax.ShapeDtypeStruct((b_pad, out_p), out_dtype),
            grid_spec=pltpu.PrefetchScalarGridSpec(
                num_scalar_prefetch=0,
                grid=(b_pad // bm,),
                in_specs=[
                    pl.BlockSpec((bm, in_p), lambda i: (i, 0)),               # x tile
                    pl.BlockSpec((in_p, hid_p), lambda i: (0, 0), **resident),  # W1
                    pl.BlockSpec((1, hid_p), lambda i: (0, 0), **resident),     # b1
                    pl.BlockSpec((hid_p, out_p), lambda i: (0, 0), **resident), # W2
                    pl.BlockSpec((1, out_p), lambda i: (0, 0), **resident),     # b2
                ],
                out_specs=pl.BlockSpec((bm, out_p), lambda i: (i, 0)),
            ),
            compiler_params=pltpu.CompilerParams(
                dimension_semantics=("parallel",),
                vmem_limit_bytes=vmem_limit,
            ),
        )(xp, w1p, b1p, w2p, b2p)
    else:
        # Hidden-dim (reduction) tiling: stream W1/W2 tiles, f32 accumulator.
        if hidden_block is not None:
            tile_h = hidden_block
        else:
            cands = sorted({c for c in (1024, 768, 512, 384, 256, 128)
                            if c <= hid_p and hid_p % c == 0}, reverse=True)
            tile_h = _LANE
            for c in cands:
                if int(1.35 * _ktiled_vmem_bytes(bm, in_p, c, out_p,
                                                 x_bytes, c_bytes, o_bytes)) <= vmem_budget:
                    tile_h = c
                    break
        assert hid_p % tile_h == 0 and tile_h % _LANE == 0
        vmem_bytes = _ktiled_vmem_bytes(bm, in_p, tile_h, out_p,
                                        x_bytes, c_bytes, o_bytes)
        vmem_limit = int(min(vmem_budget, max(32 * 2**20, int(1.35 * vmem_bytes))))
        out_padded = pl.pallas_call(
            _mlp_kernel_ktiled,
            out_shape=jax.ShapeDtypeStruct((b_pad, out_p), out_dtype),
            grid_spec=pltpu.PrefetchScalarGridSpec(
                num_scalar_prefetch=0,
                grid=(b_pad // bm, hid_p // tile_h),
                in_specs=[
                    pl.BlockSpec((bm, in_p), lambda i, h: (i, 0)),            # x tile
                    pl.BlockSpec((in_p, tile_h), lambda i, h: (0, h)),        # W1 tile
                    pl.BlockSpec((1, tile_h), lambda i, h: (0, h)),           # b1 tile
                    pl.BlockSpec((tile_h, out_p), lambda i, h: (h, 0)),       # W2 tile
                    pl.BlockSpec((1, out_p), lambda i, h: (0, 0), **resident),  # b2
                ],
                out_specs=pl.BlockSpec((bm, out_p), lambda i, h: (i, 0)),
                scratch_shapes=[pltpu.VMEM((bm, out_p), jnp.float32)],
            ),
            compiler_params=pltpu.CompilerParams(
                dimension_semantics=("parallel", "arbitrary"),
                vmem_limit_bytes=vmem_limit,
            ),
        )(xp, w1p, b1p, w2p, b2p)

    # TODO(synk): for tiny classification heads, return the padded output and
    # fold the slice into the consumer to avoid an extra copy of the padded buf.
    out_cols = out_p if out_size is None else out_size
    if (b_pad, out_cols) == (b_pad, out_p) and B == b_pad:
        return out_padded
    return out_padded[:B, :out_cols]


def init_mlp_params(key, in_size, hidden_size, out_size, dtype=jnp.float32):
    """Deterministic init mimicking nn.Linear's default U(-1/sqrt(fan_in), ...).
    Weights are returned already transposed to (in, out) layout."""
    k1, k2, k3, k4 = jax.random.split(key, 4)
    bound1 = 1.0 / jnp.sqrt(in_size)
    bound2 = 1.0 / jnp.sqrt(hidden_size)
    w1 = jax.random.uniform(k1, (in_size, hidden_size), dtype, -bound1, bound1)
    b1 = jax.random.uniform(k2, (1, hidden_size), dtype, -bound1, bound1)
    w2 = jax.random.uniform(k3, (hidden_size, out_size), dtype, -bound2, bound2)
    b2 = jax.random.uniform(k4, (1, out_size), dtype, -bound2, bound2)
    return w1, b1, w2, b2


if __name__ == "__main__":
    # Small shapes consistent with MLPNet.forward: xb is (batch, in_size).
    # NOTE: toy shapes are dominated by fixed dispatch overhead; tiling targets
    # realistic B / feature sizes.
    B, IN, HID, OUT = 8, 32, 64, 16

    key = jax.random.PRNGKey(0)
    kx, kp = jax.random.split(key)
    x = jax.random.normal(kx, (B, IN), dtype=jnp.float32)
    w1, b1, w2, b2 = init_mlp_params(kp, IN, HID, OUT)

    # Pure-JAX f32 reference of the forward semantics.
    ref = jnp.maximum(x @ w1 + b1, 0.0) @ w2 + b2

    # Strict correctness: f32 operands, f32 output, resident-weight path.
    p_f32 = prepare_params(w1, b1, w2, b2, compute_dtype=jnp.float32)
    out_f32 = jax.block_until_ready(
        mlp_forward(x, *p_f32, out_size=OUT, out_dtype=jnp.float32))
    assert out_f32.shape == (B, OUT)
    assert jnp.allclose(out_f32, ref, atol=1e-4, rtol=1e-4)

    # Hidden-tiled (reduction-axis) fallback path, forced, still f32-exact.
    out_kt = jax.block_until_ready(
        mlp_forward(x, *p_f32, out_size=OUT, out_dtype=jnp.float32,
                    hidden_block=128))
    assert out_kt.shape == (B, OUT)
    assert jnp.allclose(out_kt, ref, atol=1e-4, rtol=1e-4)

    # Performance path: bf16 MXU operands + bf16 output, f32 accumulation
    # (small drift vs the pure-f32 reference is expected).
    p_bf16 = prepare_params(w1, b1, w2, b2, compute_dtype=jnp.bfloat16)
    out_bf16 = jax.block_until_ready(mlp_forward(x, *p_bf16, out_size=OUT))
    assert out_bf16.shape == (B, OUT)
    assert jnp.allclose(out_bf16.astype(jnp.float32), ref, atol=5e-2, rtol=5e-2)

    print("KERNEL_OK")
</pallas_src>

<mosaic_0001>
module attributes {stable_mosaic.version = 11 : i64} {
  func.func @_mlp_kernel_resident(%arg0: i32, %arg1: memref<128x128xf32, #tpu.memory_space<vmem>>, %arg2: memref<128x128xf32, #tpu.memory_space<vmem>>, %arg3: memref<1x128xf32, #tpu.memory_space<vmem>>, %arg4: memref<128x128xf32, #tpu.memory_space<vmem>>, %arg5: memref<1x128xf32, #tpu.memory_space<vmem>>, %arg6: memref<128x128xf32, #tpu.memory_space<vmem>>) attributes {dimension_semantics = [#tpu.dimension_semantics<parallel>], iteration_bounds = array<i64: 1>, scalar_prefetch = 0 : i64, scratch_operands = 0 : i64, tpu.core_type = #tpu.core_type<tc>, window_params = [{transform_indices = @transform_0, window_bounds = array<i64: 128, 128>}, {pipeline_mode = #tpu.pipeline_mode<synchronous>, transform_indices = @transform_1, window_bounds = array<i64: 128, 128>}, {pipeline_mode = #tpu.pipeline_mode<synchronous>, transform_indices = @transform_2, window_bounds = array<i64: 1, 128>}, {pipeline_mode = #tpu.pipeline_mode<synchronous>, transform_indices = @transform_3, window_bounds = array<i64: 128, 128>}, {pipeline_mode = #tpu.pipeline_mode<synchronous>, transform_indices = @transform_4, window_bounds = array<i64: 1, 128>}, {transform_indices = @transform_5, window_bounds = array<i64: 128, 128>}]} {
    %c0 = arith.constant 0 : index
    %c0_0 = arith.constant 0 : index
    %0 = vector.load %arg1[%c0, %c0_0] : memref<128x128xf32, #tpu.memory_space<vmem>>, vector<128x128xf32>
    %c0_1 = arith.constant 0 : index
    %c0_2 = arith.constant 0 : index
    %1 = vector.load %arg2[%c0_1, %c0_2] : memref<128x128xf32, #tpu.memory_space<vmem>>, vector<128x128xf32>
    %cst = arith.constant dense<0.000000e+00> : vector<128x128xf32>
    %2 = tpu.matmul %0, %1, %cst {dimension_numbers = #tpu.dot_dimension_numbers<[1], [0], [0], [1], [0, 0, 1, 1], [], []>} : vector<128x128xf32>, vector<128x128xf32>, vector<128x128xf32> -> vector<128x128xf32>
    %c0_3 = arith.constant 0 : index
    %c0_4 = arith.constant 0 : index
    %3 = vector.load %arg3[%c0_3, %c0_4] : memref<1x128xf32, #tpu.memory_space<vmem>>, vector<1x128xf32>
    %4 = vector.broadcast %3 : vector<1x128xf32> to vector<128x128xf32>
    %5 = arith.addf %2, %4 : vector<128x128xf32>
    %cst_5 = arith.constant 0.000000e+00 : f32
    %6 = vector.broadcast %cst_5 : f32 to vector<128x128xf32>
    %7 = arith.maximumf %5, %6 : vector<128x128xf32>
    %c0_6 = arith.constant 0 : index
    %c0_7 = arith.constant 0 : index
    %8 = vector.load %arg4[%c0_6, %c0_7] : memref<128x128xf32, #tpu.memory_space<vmem>>, vector<128x128xf32>
    %cst_8 = arith.constant dense<0.000000e+00> : vector<128x128xf32>
    %9 = tpu.matmul %7, %8, %cst_8 {dimension_numbers = #tpu.dot_dimension_numbers<[1], [0], [0], [1], [0, 0, 1, 1], [], []>} : vector<128x128xf32>, vector<128x128xf32>, vector<128x128xf32> -> vector<128x128xf32>
    %c0_9 = arith.constant 0 : index
    %c0_10 = arith.constant 0 : index
    %10 = vector.load %arg5[%c0_9, %c0_10] : memref<1x128xf32, #tpu.memory_space<vmem>>, vector<1x128xf32>
    %11 = vector.broadcast %10 : vector<1x128xf32> to vector<128x128xf32>
    %12 = arith.addf %9, %11 : vector<128x128xf32>
    %c0_11 = arith.constant 0 : index
    %c0_12 = arith.constant 0 : index
    %13 = vector.load %arg6[%c0_11, %c0_12] : memref<128x128xf32, #tpu.memory_space<vmem>>, vector<128x128xf32>
    tpu.vector_store %arg6[%c0_11, %c0_12], %12 {strides = array<i32>} : memref<128x128xf32, #tpu.memory_space<vmem>>, vector<128x128xf32>,
    return
  }
  func.func @transform_0(%arg0: i32) -> (i32, i32) {
    %c0_i32 = arith.constant 0 : i32
    %c0_i32_0 = arith.constant 0 : i32
    return %arg0, %c0_i32 : i32, i32
  }
  func.func @transform_1(%arg0: i32) -> (i32, i32) {
    %c0_i32 = arith.constant 0 : i32
    %c0_i32_0 = arith.constant 0 : i32
    %c0_i32_1 = arith.constant 0 : i32
    return %c0_i32, %c0_i32_0 : i32, i32
  }
  func.func @transform_2(%arg0: i32) -> (i32, i32) {
    %c0_i32 = arith.constant 0 : i32
    %c0_i32_0 = arith.constant 0 : i32
    %c0_i32_1 = arith.constant 0 : i32
    return %c0_i32, %c0_i32_0 : i32, i32
  }
  func.func @transform_3(%arg0: i32) -> (i32, i32) {
    %c0_i32 = arith.constant 0 : i32
    %c0_i32_0 = arith.constant 0 : i32
    %c0_i32_1 = arith.constant 0 : i32
    return %c0_i32, %c0_i32_0 : i32, i32
  }
  func.func @transform_4(%arg0: i32) -> (i32, i32) {
    %c0_i32 = arith.constant 0 : i32
    %c0_i32_0 = arith.constant 0 : i32
    %c0_i32_1 = arith.constant 0 : i32
    return %c0_i32, %c0_i32_0 : i32, i32
  }
  func.func @transform_5(%arg0: i32) -> (i32, i32) {
    %c0_i32 = arith.constant 0 : i32
    %c0_i32_0 = arith.constant 0 : i32
    return %arg0, %c0_i32 : i32, i32
  }
}

</mosaic_0001>

<llo_original>
// kernel: mlp_forward.1
$region0: #{mlp_forward.1}
  #allocation0 [shape = 'u32[]', space=smem, size = 0x4, offset = 0x4, fixed_abs, tag = 'smem constant byte address 0x4 - core index']
  #allocation1 [shape = 'u32[144,128]{1,0:T(1,128)}', space=vmem, size = 0x12000, scoped, tag = 'internal scratch']
  %s0 = inlined_call_operand.vmem [shape: f32[128,128], index: 0, kind: input, shape index: {}]
  %s1 = inlined_call_operand.vmem [shape: f32[128,128], index: 1, kind: input, shape index: {}]
  %s2 = inlined_call_operand.vmem [shape: f32[1,128], index: 2, kind: input, shape index: {}]
  %s3 = inlined_call_operand.hbm [shape: f32[128,128], index: 3, kind: input, shape index: {}]
  %s4 = inlined_call_operand.vmem [shape: f32[1,128], index: 4, kind: input, shape index: {}]
  %s5 = inlined_call_operand.vmem [shape: f32[128,128], index: 5, kind: output, shape index: {}]
  %s6 = sld [smem:[#allocation0]]
  $region34: #{mlp_forward.1} parent=0
    _
  %s8 = ssub.s32 1, %s6
  %s9 = scalar_select 0, %s8, %s6
  $region1: #{mlp_forward.1} parent=0
    #allocation2 [shape = 'u8[65536]{0}', space=vmem, size = 0x10000, scoped, tag = 'input window, operand 3, single buffered']
    #allocation3 [shape = 's32[1]{0}', space=sflag, size = 0x4, scoped, tag = 'scoped memory for mlp_forward.1']
    %10 = vsyncpa [#allocation3], 0
    // Predicated region
    $region2: #{mlp_forward.1} parent=1 // pred_check
      _
    $region3: #{mlp_forward.1} parent=1 // pred_check_branch
      %12 = sbr.rel (0) target = $region5
    $region4: #{mlp_forward.1} parent=1 // pred_region
      _
    $region5: #{mlp_forward.1} parent=1 // pred_fallthru
      _
    // Predicated region
    $region6: #{mlp_forward.1} parent=1 // pred_check
      _
    $region7: #{mlp_forward.1} parent=1 // pred_check_branch
      %14 = sbr.rel (0) target = $region9
    $region8: #{mlp_forward.1} parent=1 // pred_region
      _
    $region9: #{mlp_forward.1} parent=1 // pred_fallthru
      _
    // Predicated region
    $region10: #{mlp_forward.1} parent=1 // pred_check
      _
    $region11: #{mlp_forward.1} parent=1 // pred_check_branch
      %16 = sbr.rel (0) target = $region13
    $region12: #{mlp_forward.1} parent=1 // pred_region
      _
    $region13: #{mlp_forward.1} parent=1 // pred_fallthru
      _
    // Predicated region
    $region14: #{mlp_forward.1} parent=1 // pred_check
      _
    $region15: #{mlp_forward.1} parent=1 // pred_check_branch
      %18 = sbr.rel (0) target = $region17
    $region16: #{mlp_forward.1} parent=1 // pred_region
      %s20 = ssub.s32 2048, 2048
      %21 = vsyncadd [#allocation3], %s20
      %s22 = sshll.u32 [#allocation2], 4
      %s23 = int_to_ptr.vmem [resolvable:$true] %s22
      %28 = dma.hbm_to_vmem [thread:$0]  %s3, 2048, %s23, [#allocation3], 128, 128, 8
    $region17: #{mlp_forward.1} parent=1 // pred_fallthru
      _
    // Predicated region
    $region18: #{mlp_forward.1} parent=1 // pred_check
      _
    $region19: #{mlp_forward.1} parent=1 // pred_check_branch
      %30 = sbr.rel (0) target = $region21
    $region20: #{mlp_forward.1} parent=1 // pred_region
      _
    $region21: #{mlp_forward.1} parent=1 // pred_fallthru
      _
    // Predicated region
    $region22: #{mlp_forward.1} parent=1 // pred_check
      _
    $region23: #{mlp_forward.1} parent=1 // pred_check_branch
      %32 = sbr.rel (0) target = $region25
    $region24: #{mlp_forward.1} parent=1 // pred_region
      %33 = dma.done [#allocation3], 2048
    $region25: #{mlp_forward.1} parent=1 // pred_fallthru
      _
    %v34 = vld [vmem:[%s0] sm:$0xff]
    %v35 = vld [vmem:[%s0 + $0x8] sm:$0xff]
    %v36 = vld [vmem:[%s0 + $0x10] sm:$0xff]
    %v37 = vld [vmem:[%s0 + $0x18] sm:$0xff]
    %v38 = vld [vmem:[%s0 + $0x20] sm:$0xff]
    %v39 = vld [vmem:[%s0 + $0x28] sm:$0xff]
    %v40 = vld [vmem:[%s0 + $0x30] sm:$0xff]
    %v41 = vld [vmem:[%s0 + $0x38] sm:$0xff]
    %v42 = vld [vmem:[%s0 + $0x40] sm:$0xff]
    %v43 = vld [vmem:[%s0 + $0x48] sm:$0xff]
    %v44 = vld [vmem:[%s0 + $0x50] sm:$0xff]
    %v45 = vld [vmem:[%s0 + $0x58] sm:$0xff]
    %v46 = vld [vmem:[%s0 + $0x60] sm:$0xff]
    %v47 = vld [vmem:[%s0 + $0x68] sm:$0xff]
    %v48 = vld [vmem:[%s0 + $0x70] sm:$0xff]
    %v49 = vld [vmem:[%s0 + $0x78] sm:$0xff]
    %v50 = vld [vmem:[%s1] sm:$0xff]
    %v51 = vld [vmem:[%s1 + $0x8] sm:$0xff]
    %v52 = vld [vmem:[%s1 + $0x10] sm:$0xff]
    %v53 = vld [vmem:[%s1 + $0x18] sm:$0xff]
    %v54 = vld [vmem:[%s1 + $0x20] sm:$0xff]
    %v55 = vld [vmem:[%s1 + $0x28] sm:$0xff]
    %v56 = vld [vmem:[%s1 + $0x30] sm:$0xff]
    %v57 = vld [vmem:[%s1 + $0x38] sm:$0xff]
    %v58 = vld [vmem:[%s1 + $0x40] sm:$0xff]
    %v59 = vld [vmem:[%s1 + $0x48] sm:$0xff]
    %v60 = vld [vmem:[%s1 + $0x50] sm:$0xff]
    %v61 = vld [vmem:[%s1 + $0x58] sm:$0xff]
    %v62 = vld [vmem:[%s1 + $0x60] sm:$0xff]
    %v63 = vld [vmem:[%s1 + $0x68] sm:$0xff]
    %v64 = vld [vmem:[%s1 + $0x70] sm:$0xff]
    %v65 = vld [vmem:[%s1 + $0x78] sm:$0xff]
    %v66 = vld [vmem:[%s2] sm:$0x1]
    %v68 = vlaneseq
    %v69 = vshrl.u32 %v68, 7
    %v70 = vsub.s32 0, %v69
    %v71 = vrot.slane %v66, %v70
    %73 = vmatprep.subr.mxu0 0.0
    %74 = vmatpush1.msra.mxu0 %v65
    %75 = vmatprep.subr.mxu0 0.0
    %76 = vmatpush1.msra.mxu0 %v64
    %77 = vmatprep.subr.mxu0 0.0
    %78 = vmatpush1.msra.mxu0 %v63
    %79 = vmatprep.subr.mxu0 0.0
    %80 = vmatpush1.msra.mxu0 %v62
    %81 = vmatprep.subr.mxu0 0.0
    %82 = vmatpush1.msra.mxu0 %v61
    %83 = vmatprep.subr.mxu0 0.0
    %84 = vmatpush1.msra.mxu0 %v60
    %85 = vmatprep.subr.mxu0 0.0
    %86 = vmatpush1.msra.mxu0 %v59
    %87 = vmatprep.subr.mxu0 0.0
    %88 = vmatpush1.msra.mxu0 %v58
    %89 = vmatprep.subr.mxu0 0.0
    %90 = vmatpush1.msra.mxu0 %v57
    %91 = vmatprep.subr.mxu0 0.0
    %92 = vmatpush1.msra.mxu0 %v56
    %93 = vmatprep.subr.mxu0 0.0
    %94 = vmatpush1.msra.mxu0 %v55
    %95 = vmatprep.subr.mxu0 0.0
    %96 = vmatpush1.msra.mxu0 %v54
    %97 = vmatprep.subr.mxu0 0.0
    %98 = vmatpush1.msra.mxu0 %v53
    %99 = vmatprep.subr.mxu0 0.0
    %100 = vmatpush1.msra.mxu0 %v52
    %101 = vmatprep.subr.mxu0 0.0
    %102 = vmatpush1.msra.mxu0 %v51
    %103 = vmatprep.subr.mxu0 0.0
    %104 = vmatpush1.msra.mxu0 %v50
    %105 = vmatprep.subr.mxu0 0.0
    %106 = vmatpush2.msra.mxu0 0.0
    %107 = vmatprep.subr.mxu0 0.0
    %108 = vmatpush2.msra.mxu0 0.0
    %109 = vmatprep.subr.mxu0 0.0
    %110 = vmatpush2.msra.mxu0 0.0
    %111 = vmatprep.subr.mxu0 0.0
    %112 = vmatpush2.msra.mxu0 0.0
    %113 = vmatprep.subr.mxu0 0.0
    %114 = vmatpush2.msra.mxu0 0.0
    %115 = vmatprep.subr.mxu0 0.0
    %116 = vmatpush2.msra.mxu0 0.0
    %117 = vmatprep.subr.mxu0 0.0
    %118 = vmatpush2.msra.mxu0 0.0
    %119 = vmatprep.subr.mxu0 0.0
    %120 = vmatpush2.msra.mxu0 0.0
    %121 = vmatprep.subr.mxu0 0.0
    %122 = vmatpush2.msra.mxu0 0.0
    %123 = vmatprep.subr.mxu0 0.0
    %124 = vmatpush2.msra.mxu0 0.0
    %125 = vmatprep.subr.mxu0 0.0
    %126 = vmatpush2.msra.mxu0 0.0
    %127 = vmatprep.subr.mxu0 0.0
    %128 = vmatpush2.msra.mxu0 0.0
    %129 = vmatprep.subr.mxu0 0.0
    %130 = vmatpush2.msra.mxu0 0.0
    %131 = vmatprep.subr.mxu0 0.0
    %132 = vmatpush2.msra.mxu0 0.0
    %133 = vmatprep.subr.mxu0 0.0
    %134 = vmatpush2.msra.mxu0 0.0
    %135 = vmatprep.subr.mxu0 0.0
    %136 = vmatpush2.msra.mxu0 0.0
    %137 = vmatprep.mubr.f32.mxu0 0.0
    %138 = vmatmul.mubr.f32.gmra.mxu0 %v34
    %v139 = vpop.f32.mrf.mxu0
    %v140 = vadd.f32 %v71, %v139
    %v141 = vpop.f32.mrf.mxu0
    %142 = vmatprep.mubr.f32.mxu0 0.0
    %143 = vmatmul.mubr.f32.gmra.mxu0 %v35
    %v144 = vpop.f32.mrf.mxu0
    %v145 = vadd.f32 %v71, %v144
    %v146 = vpop.f32.mrf.mxu0
    %147 = vmatprep.mubr.f32.mxu0 0.0
    %148 = vmatmul.mubr.f32.gmra.mxu0 %v36
    %v149 = vpop.f32.mrf.mxu0
    %v150 = vadd.f32 %v71, %v149
    %v151 = vpop.f32.mrf.mxu0
    %152 = vmatprep.mubr.f32.mxu0 0.0
    %153 = vmatmul.mubr.f32.gmra.mxu0 %v37
    %v154 = vpop.f32.mrf.mxu0
    %v155 = vadd.f32 %v71, %v154
    %v156 = vpop.f32.mrf.mxu0
    %157 = vmatprep.mubr.f32.mxu0 0.0
    %158 = vmatmul.mubr.f32.gmra.mxu0 %v38
    %v159 = vpop.f32.mrf.mxu0
    %v160 = vadd.f32 %v71, %v159
    %v161 = vpop.f32.mrf.mxu0
    %162 = vmatprep.mubr.f32.mxu0 0.0
    %163 = vmatmul.mubr.f32.gmra.mxu0 %v39
    %v164 = vpop.f32.mrf.mxu0
    %v165 = vadd.f32 %v71, %v164
    %v166 = vpop.f32.mrf.mxu0
    %167 = vmatprep.mubr.f32.mxu0 0.0
    %168 = vmatmul.mubr.f32.gmra.mxu0 %v40
    %v169 = vpop.f32.mrf.mxu0
    %v170 = vadd.f32 %v71, %v169
    %v171 = vpop.f32.mrf.mxu0
    %172 = vmatprep.mubr.f32.mxu0 0.0
    %173 = vmatmul.mubr.f32.gmra.mxu0 %v41
    %v174 = vpop.f32.mrf.mxu0
    %v175 = vadd.f32 %v71, %v174
    %v176 = vpop.f32.mrf.mxu0
    %177 = vmatprep.mubr.f32.mxu0 0.0
    %178 = vmatmul.mubr.f32.gmra.mxu0 %v42
    %v179 = vpop.f32.mrf.mxu0
    %v180 = vadd.f32 %v71, %v179
    %v181 = vpop.f32.mrf.mxu0
    %182 = vmatprep.mubr.f32.mxu0 0.0
    %183 = vmatmul.mubr.f32.gmra.mxu0 %v43
    %v184 = vpop.f32.mrf.mxu0
    %v185 = vadd.f32 %v71, %v184
    %v186 = vpop.f32.mrf.mxu0
    %187 = vmatprep.mubr.f32.mxu0 0.0
    %188 = vmatmul.mubr.f32.gmra.mxu0 %v44
    %v189 = vpop.f32.mrf.mxu0
    %v190 = vadd.f32 %v71, %v189
    %v191 = vpop.f32.mrf.mxu0
    %192 = vmatprep.mubr.f32.mxu0 0.0
    %193 = vmatmul.mubr.f32.gmra.mxu0 %v45
    %v194 = vpop.f32.mrf.mxu0
    %v195 = vadd.f32 %v71, %v194
    %v196 = vpop.f32.mrf.mxu0
    %197 = vmatprep.mubr.f32.mxu0 0.0
    %198 = vmatmul.mubr.f32.gmra.mxu0 %v46
    %v199 = vpop.f32.mrf.mxu0
    %v200 = vadd.f32 %v71, %v199
    %v201 = vpop.f32.mrf.mxu0
    %202 = vmatprep.mubr.f32.mxu0 0.0
    %203 = vmatmul.mubr.f32.gmra.mxu0 %v47
    %v204 = vpop.f32.mrf.mxu0
    %v205 = vadd.f32 %v71, %v204
    %v206 = vpop.f32.mrf.mxu0
    %207 = vmatprep.mubr.f32.mxu0 0.0
    %208 = vmatmul.mubr.f32.gmra.mxu0 %v48
    %v209 = vpop.f32.mrf.mxu0
    %v210 = vadd.f32 %v71, %v209
    %v211 = vpop.f32.mrf.mxu0
    %212 = vmatprep.mubr.f32.mxu0 0.0
    %213 = vmatmul.mubr.f32.gmra.mxu0 %v49
    %v214 = vpop.f32.mrf.mxu0
    %v215 = vadd.f32 %v71, %v214
    %v216 = vpop.f32.mrf.mxu0
    %217 = vdwg.mxu0
    %v218 = vmax.f32 %v140, 0.0
    %v219 = vmax.f32 %v145, 0.0
    %v220 = vmax.f32 %v150, 0.0
    %v221 = vmax.f32 %v155, 0.0
    %v222 = vmax.f32 %v160, 0.0
    %v223 = vmax.f32 %v165, 0.0
    %v224 = vmax.f32 %v170, 0.0
    %v225 = vmax.f32 %v175, 0.0
    %v226 = vmax.f32 %v180, 0.0
    %v227 = vmax.f32 %v185, 0.0
    %v228 = vmax.f32 %v190, 0.0
    %v229 = vmax.f32 %v195, 0.0
    %v230 = vmax.f32 %v200, 0.0
    %v231 = vmax.f32 %v205, 0.0
    %v232 = vmax.f32 %v210, 0.0
    %v233 = vmax.f32 %v215, 0.0
    %v234 = vld [vmem:[#allocation2] sm:$0xff]
    %v235 = vld [vmem:[#allocation2 + $0x8] sm:$0xff]
    %v236 = vld [vmem:[#allocation2 + $0x10] sm:$0xff]
    %v237 = vld [vmem:[#allocation2 + $0x18] sm:$0xff]
    %v238 = vld [vmem:[#allocation2 + $0x20] sm:$0xff]
    %v239 = vld [vmem:[#allocation2 + $0x28] sm:$0xff]
    %v240 = vld [vmem:[#allocation2 + $0x30] sm:$0xff]
    %v241 = vld [vmem:[#allocation2 + $0x38] sm:$0xff]
    %v242 = vld [vmem:[#allocation2 + $0x40] sm:$0xff]
    %v243 = vld [vmem:[#allocation2 + $0x48] sm:$0xff]
    %v244 = vld [vmem:[#allocation2 + $0x50] sm:$0xff]
    %v245 = vld [vmem:[#allocation2 + $0x58] sm:$0xff]
    %v246 = vld [vmem:[#allocation2 + $0x60] sm:$0xff]
    %v247 = vld [vmem:[#allocation2 + $0x68] sm:$0xff]
    %v248 = vld [vmem:[#allocation2 + $0x70] sm:$0xff]
    %v249 = vld [vmem:[#allocation2 + $0x78] sm:$0xff]
    %v250 = vld [vmem:[%s4] sm:$0x1]
    %v252 = vlaneseq
    %v253 = vshrl.u32 %v252, 7
    %v254 = vsub.s32 0, %v253
    %v255 = vrot.slane %v250, %v254
    %257 = vmatprep.subr.mxu0 0.0
    %258 = vmatpush1.msra.mxu0 %v249
    %259 = vmatprep.subr.mxu0 0.0
    %260 = vmatpush1.msra.mxu0 %v248
    %261 = vmatprep.subr.mxu0 0.0
    %262 = vmatpush1.msra.mxu0 %v247
    %263 = vmatprep.subr.mxu0 0.0
    %264 = vmatpush1.msra.mxu0 %v246
    %265 = vmatprep.subr.mxu0 0.0
    %266 = vmatpush1.msra.mxu0 %v245
    %267 = vmatprep.subr.mxu0 0.0
    %268 = vmatpush1.msra.mxu0 %v244
    %269 = vmatprep.subr.mxu0 0.0
    %270 = vmatpush1.msra.mxu0 %v243
    %271 = vmatprep.subr.mxu0 0.0
    %272 = vmatpush1.msra.mxu0 %v242
    %273 = vmatprep.subr.mxu0 0.0
    %274 = vmatpush1.msra.mxu0 %v241
    %275 = vmatprep.subr.mxu0 0.0
    %276 = vmatpush1.msra.mxu0 %v240
    %277 = vmatprep.subr.mxu0 0.0
    %278 = vmatpush1.msra.mxu0 %v239
    %279 = vmatprep.subr.mxu0 0.0
    %280 = vmatpush1.msra.mxu0 %v238
    %281 = vmatprep.subr.mxu0 0.0
    %282 = vmatpush1.msra.mxu0 %v237
    %283 = vmatprep.subr.mxu0 0.0
    %284 = vmatpush1.msra.mxu0 %v236
    %285 = vmatprep.subr.mxu0 0.0
    %286 = vmatpush1.msra.mxu0 %v235
    %287 = vmatprep.subr.mxu0 0.0
    %288 = vmatpush1.msra.mxu0 %v234
    %289 = vmatprep.subr.mxu0 0.0
    %290 = vmatpush2.msra.mxu0 0.0
    %291 = vmatprep.subr.mxu0 0.0
    %292 = vmatpush2.msra.mxu0 0.0
    %293 = vmatprep.subr.mxu0 0.0
    %294 = vmatpush2.msra.mxu0 0.0
    %295 = vmatprep.subr.mxu0 0.0
    %296 = vmatpush2.msra.mxu0 0.0
    %297 = vmatprep.subr.mxu0 0.0
    %298 = vmatpush2.msra.mxu0 0.0
    %299 = vmatprep.subr.mxu0 0.0
    %300 = vmatpush2.msra.mxu0 0.0
    %301 = vmatprep.subr.mxu0 0.0
    %302 = vmatpush2.msra.mxu0 0.0
    %303 = vmatprep.subr.mxu0 0.0
    %304 = vmatpush2.msra.mxu0 0.0
    %305 = vmatprep.subr.mxu0 0.0
    %306 = vmatpush2.msra.mxu0 0.0
    %307 = vmatprep.subr.mxu0 0.0
    %308 = vmatpush2.msra.mxu0 0.0
    %309 = vmatprep.subr.mxu0 0.0
    %310 = vmatpush2.msra.mxu0 0.0
    %311 = vmatprep.subr.mxu0 0.0
    %312 = vmatpush2.msra.mxu0 0.0
    %313 = vmatprep.subr.mxu0 0.0
    %314 = vmatpush2.msra.mxu0 0.0
    %315 = vmatprep.subr.mxu0 0.0
    %316 = vmatpush2.msra.mxu0 0.0
    %317 = vmatprep.subr.mxu0 0.0
    %318 = vmatpush2.msra.mxu0 0.0
    %319 = vmatprep.subr.mxu0 0.0
    %320 = vmatpush2.msra.mxu0 0.0
    %321 = vmatprep.mubr.f32.mxu0 0.0
    %322 = vmatmul.mubr.f32.gmra.mxu0 %v218
    %v323 = vpop.f32.mrf.mxu0
    %v324 = vadd.f32 %v255, %v323
    %v325 = vpop.f32.mrf.mxu0
    %326 = vmatprep.mubr.f32.mxu0 0.0
    %327 = vmatmul.mubr.f32.gmra.mxu0 %v219
    %v328 = vpop.f32.mrf.mxu0
    %v329 = vadd.f32 %v255, %v328
    %v330 = vpop.f32.mrf.mxu0
    %331 = vmatprep.mubr.f32.mxu0 0.0
    %332 = vmatmul.mubr.f32.gmra.mxu0 %v220
    %v333 = vpop.f32.mrf.mxu0
    %v334 = vadd.f32 %v255, %v333
    %v335 = vpop.f32.mrf.mxu0
    %336 = vmatprep.mubr.f32.mxu0 0.0
    %337 = vmatmul.mubr.f32.gmra.mxu0 %v221
    %v338 = vpop.f32.mrf.mxu0
    %v339 = vadd.f32 %v255, %v338
    %v340 = vpop.f32.mrf.mxu0
    %341 = vmatprep.mubr.f32.mxu0 0.0
    %342 = vmatmul.mubr.f32.gmra.mxu0 %v222
    %v343 = vpop.f32.mrf.mxu0
    %v344 = vadd.f32 %v255, %v343
    %v345 = vpop.f32.mrf.mxu0
    %346 = vmatprep.mubr.f32.mxu0 0.0
    %347 = vmatmul.mubr.f32.gmra.mxu0 %v223
    %v348 = vpop.f32.mrf.mxu0
    %v349 = vadd.f32 %v255, %v348
    %v350 = vpop.f32.mrf.mxu0
    %351 = vmatprep.mubr.f32.mxu0 0.0
    %352 = vmatmul.mubr.f32.gmra.mxu0 %v224
    %v353 = vpop.f32.mrf.mxu0
    %v354 = vadd.f32 %v255, %v353
    %v355 = vpop.f32.mrf.mxu0
    %356 = vmatprep.mubr.f32.mxu0 0.0
    %357 = vmatmul.mubr.f32.gmra.mxu0 %v225
    %v358 = vpop.f32.mrf.mxu0
    %v359 = vadd.f32 %v255, %v358
    %v360 = vpop.f32.mrf.mxu0
    %361 = vmatprep.mubr.f32.mxu0 0.0
    %362 = vmatmul.mubr.f32.gmra.mxu0 %v226
    %v363 = vpop.f32.mrf.mxu0
    %v364 = vadd.f32 %v255, %v363
    %v365 = vpop.f32.mrf.mxu0
    %366 = vmatprep.mubr.f32.mxu0 0.0
    %367 = vmatmul.mubr.f32.gmra.mxu0 %v227
    %v368 = vpop.f32.mrf.mxu0
    %v369 = vadd.f32 %v255, %v368
    %v370 = vpop.f32.mrf.mxu0
    %371 = vmatprep.mubr.f32.mxu0 0.0
    %372 = vmatmul.mubr.f32.gmra.mxu0 %v228
    %v373 = vpop.f32.mrf.mxu0
    %v374 = vadd.f32 %v255, %v373
    %v375 = vpop.f32.mrf.mxu0
    %376 = vmatprep.mubr.f32.mxu0 0.0
    %377 = vmatmul.mubr.f32.gmra.mxu0 %v229
    %v378 = vpop.f32.mrf.mxu0
    %v379 = vadd.f32 %v255, %v378
    %v380 = vpop.f32.mrf.mxu0
    %381 = vmatprep.mubr.f32.mxu0 0.0
    %382 = vmatmul.mubr.f32.gmra.mxu0 %v230
    %v383 = vpop.f32.mrf.mxu0
    %v384 = vadd.f32 %v255, %v383
    %v385 = vpop.f32.mrf.mxu0
    %386 = vmatprep.mubr.f32.mxu0 0.0
    %387 = vmatmul.mubr.f32.gmra.mxu0 %v231
    %v388 = vpop.f32.mrf.mxu0
    %v389 = vadd.f32 %v255, %v388
    %v390 = vpop.f32.mrf.mxu0
    %391 = vmatprep.mubr.f32.mxu0 0.0
    %392 = vmatmul.mubr.f32.gmra.mxu0 %v232
    %v393 = vpop.f32.mrf.mxu0
    %v394 = vadd.f32 %v255, %v393
    %v395 = vpop.f32.mrf.mxu0
    %396 = vmatprep.mubr.f32.mxu0 0.0
    %397 = vmatmul.mubr.f32.gmra.mxu0 %v233
    %v398 = vpop.f32.mrf.mxu0
    %v399 = vadd.f32 %v255, %v398
    %v400 = vpop.f32.mrf.mxu0
    %401 = vdwg.mxu0
    %402 = vst [vmem:[%s5] sm:$0xff] %v324
    %403 = vst [vmem:[%s5 + $0x8] sm:$0xff] %v329
    %404 = vst [vmem:[%s5 + $0x10] sm:$0xff] %v334
    %405 = vst [vmem:[%s5 + $0x18] sm:$0xff] %v339
    %406 = vst [vmem:[%s5 + $0x20] sm:$0xff] %v344
    %407 = vst [vmem:[%s5 + $0x28] sm:$0xff] %v349
    %408 = vst [vmem:[%s5 + $0x30] sm:$0xff] %v354
    %409 = vst [vmem:[%s5 + $0x38] sm:$0xff] %v359
    %410 = vst [vmem:[%s5 + $0x40] sm:$0xff] %v364
    %411 = vst [vmem:[%s5 + $0x48] sm:$0xff] %v369
    %412 = vst [vmem:[%s5 + $0x50] sm:$0xff] %v374
    %413 = vst [vmem:[%s5 + $0x58] sm:$0xff] %v379
    %414 = vst [vmem:[%s5 + $0x60] sm:$0xff] %v384
    %415 = vst [vmem:[%s5 + $0x68] sm:$0xff] %v389
    %416 = vst [vmem:[%s5 + $0x70] sm:$0xff] %v394
    %417 = vst [vmem:[%s5 + $0x78] sm:$0xff] %v399
    // Predicated region
    $region26: #{mlp_forward.1} parent=1 // pred_check
      _
    $region27: #{mlp_forward.1} parent=1 // pred_check_branch
      %419 = sbr.rel (0) target = $region29
    $region28: #{mlp_forward.1} parent=1 // pred_region
      _
    $region29: #{mlp_forward.1} parent=1 // pred_fallthru
      _
    // Predicated region
    $region30: #{mlp_forward.1} parent=1 // pred_check
      _
    $region31: #{mlp_forward.1} parent=1 // pred_check_branch
      %421 = sbr.rel (0) target = $region33
    $region32: #{mlp_forward.1} parent=1 // pred_region
      _
    $region33: #{mlp_forward.1} parent=1 // pred_fallthru
      _
    %422 = vsyncpa [#allocation3], 1

</llo_original>
